<compile_context>
chip_gen: v6e
topology: v6e:2x2x1
jax: 0.10.0
libtpu: 0.0.40
codegen_flags: <defaults>
</compile_context>

<pallas_src>
import functools
import math

import jax
import jax.numpy as jnp
from jax.experimental import pallas as pl
from jax.experimental.pallas import tpu as pltpu


_LN_EPS = 1e-5
_INV_SQRT2 = 0.7071067811865476


# ----------------------------------------------------------------------------
# small math helpers (pure jnp; usable both inside kernels and in the reference)
# ----------------------------------------------------------------------------
def _layer_norm(x, w, b, eps=_LN_EPS):
    mean = jnp.mean(x, axis=-1, keepdims=True)
    var = jnp.mean((x - mean) ** 2, axis=-1, keepdims=True)
    return (x - mean) * jax.lax.rsqrt(var + eps) * w + b


def _erf_poly(z):
    # Abramowitz & Stegun 7.1.26, |err| < 1.5e-7.  Uses only abs/exp/mul/add/where,
    # so it lowers cleanly in Pallas (no reliance on a native erf op).
    # The reciprocal goes to the EUP slot (approx) instead of a long VALU divide.
    a1, a2, a3, a4, a5 = (0.254829592, -0.284496736, 1.421413741,
                          -1.453152027, 1.061405429)
    p = 0.3275911
    az = jnp.abs(z)
    t = pl.reciprocal(1.0 + p * az, approx=True)
    poly = t * (a1 + t * (a2 + t * (a3 + t * (a4 + t * a5))))
    res = 1.0 - poly * jnp.exp(-az * az)
    return jnp.where(z >= 0.0, res, -res)


def _gelu_exact(x):
    # Matches PyTorch nn.GELU() (exact/erf form) closely (approx reciprocal adds
    # ~1e-4-level error).  Only used inside Pallas kernels.
    return 0.5 * x * (1.0 + _erf_poly(x * _INV_SQRT2))


# ----------------------------------------------------------------------------
# Pallas kernels
# ----------------------------------------------------------------------------
def _patch_proj_kernel(p_ref, w_ref, b_ref, o_ref):
    # p_ref: (1, nP, C*P*P) f32, w_ref: (C*P*P, E) bf16, b_ref: (1, E) f32
    o_ref[0] = (jnp.dot(p_ref[0].astype(jnp.bfloat16), w_ref[...],
                        preferred_element_type=jnp.float32)
                + b_ref[0])


def _msa_kernel(x_ref, ln_w_ref, ln_b_ref, w_in_ref, b_in_ref,
                w_out_ref, b_out_ref, o_ref, *, num_heads, head_dim, seq_valid):
    # x_ref block: (1, S, E) f32.  x is both the LN input and the residual input.
    x = x_ref[0]
    S = x.shape[0]
    E = num_heads * head_dim

    # LayerNorm statistics in f32 (no bf16 VPU on v5e).
    xn = _layer_norm(x, ln_w_ref[0], ln_b_ref[0])

    # Packed QKV projection: bf16 operands, f32 MXU accumulation.
    # 1/sqrt(head_dim) is already folded into the Q columns of W_in^T and b_in.
    qkv = jnp.dot(xn.astype(jnp.bfloat16), w_in_ref[...],
                  preferred_element_type=jnp.float32) + b_in_ref[0]
    qkv16 = qkv.astype(jnp.bfloat16)     # single cast; halves live intermediate
    q = qkv16[:, 0 * E:1 * E]
    k = qkv16[:, 1 * E:2 * E]
    v = qkv16[:, 2 * E:3 * E]

    # Key-padding mask (S is padded to a multiple of 8; only seq_valid keys exist).
    if seq_valid < S:
        key_mask = jax.lax.broadcasted_iota(jnp.int32, (1, S), 1) < seq_valid

    w_out = w_out_ref[...]                         # (E, E) bf16, loaded once

    # Per-head attention with the out-projection fused into a running (S, E)
    # f32 accumulator (no concatenate).  Residual + out-proj bias folded into
    # the accumulator init, so the final store is the block output directly.
    # TODO(synk): on v6e/v7x, process head pairs (128-lane groups) and stage the
    # attention output into an (S, E) bf16 scratch so the out-projection becomes
    # a single (S,E)@(E,E) matmul contracting over E.
    acc = x + b_out_ref[0]
    for h in range(num_heads):
        sl = slice(h * head_dim, (h + 1) * head_dim)
        qh = q[:, sl]                               # (S, Dh) bf16
        kh = k[:, sl]
        vh = v[:, sl]

        # Contract the last axes directly on the MXU (no kh.T / XLU transpose).
        scores = jax.lax.dot_general(
            qh, kh, (((1,), (1,)), ((), ())),
            preferred_element_type=jnp.float32)     # (S, S) f32

        if seq_valid < S:
            scores = jnp.where(key_mask, scores, -1e30)

        scores = scores - jnp.max(scores, axis=-1, keepdims=True)
        p = jnp.exp(scores)
        p = p * pl.reciprocal(jnp.sum(p, axis=-1, keepdims=True), approx=True)

        oh = jnp.dot(p.astype(jnp.bfloat16), vh,
                     preferred_element_type=jnp.float32)      # (S, Dh)
        acc = acc + jnp.dot(oh.astype(jnp.bfloat16), w_out[sl, :],
                            preferred_element_type=jnp.float32)

    o_ref[0] = acc                                  # attention out + b_out + x


def _mlp_kernel(x_ref, ln_w_ref, ln_b_ref, w1_ref, b1_ref, w2_ref, b2_ref, o_ref):
    # TODO(synk): for v7x (64 MiB VMEM) at ViT-B/L shapes, tile the hidden dim M
    # as a trailing "arbitrary" grid axis with an f32 accumulator scratch.
    x = x_ref[0]                                    # (S, E) f32, residual input
    xn = _layer_norm(x, ln_w_ref[0], ln_b_ref[0])
    h = jnp.dot(xn.astype(jnp.bfloat16), w1_ref[...],
                preferred_element_type=jnp.float32) + b1_ref[0]
    h = _gelu_exact(h)                              # f32 elementwise
    o_ref[0] = (x + b2_ref[0]
                + jnp.dot(h.astype(jnp.bfloat16), w2_ref[...],
                          preferred_element_type=jnp.float32))


def _classifier_kernel(x_ref, ln_w_ref, ln_b_ref, w_ref, b_ref, o_ref):
    xn = _layer_norm(x_ref[...], ln_w_ref[0], ln_b_ref[0])     # (B, E) f32
    o_ref[...] = (jnp.dot(xn, w_ref[...], preferred_element_type=jnp.float32)
                  + b_ref[0])


# ----------------------------------------------------------------------------
# pallas_call wrappers
# ----------------------------------------------------------------------------
def _per_batch_call(kernel, x, weights, out_last, *, cost_estimate=None,
                    interm_bytes=0):
    """Grid over the batch dim; x is (B, S, F); weights are 2-D arrays broadcast
    to every grid step (single-buffered); output is (B, S, out_last) f32."""
    B, S, F = x.shape
    in_specs = [pl.BlockSpec((1, S, F), lambda b: (b, 0, 0))]
    for w in weights:
        r, c = w.shape
        # Constant index_map -> no re-DMA across grid steps; single buffer is enough.
        in_specs.append(pl.BlockSpec((r, c), lambda b: (0, 0),
                                     pipeline_mode=pl.Buffered(1)))

    # Explicit scoped-VMEM limit sized from the real block footprint:
    #   double-buffered x/out blocks + single-buffered weights + intermediates,
    # with 2x headroom, floored at 32 MiB and capped at 64 MiB (v7x physical).
    x_blk = S * F * 4
    out_blk = S * out_last * 4
    w_bytes = sum(int(w.size) * w.dtype.itemsize for w in weights)
    vmem_need = 2 * (x_blk + out_blk) + w_bytes + int(interm_bytes)
    vmem_limit = int(min(max(2 * vmem_need, 32 * 1024 * 1024), 64 * 1024 * 1024))

    return pl.pallas_call(
        kernel,
        out_shape=jax.ShapeDtypeStruct((B, S, out_last), jnp.float32),
        grid_spec=pltpu.PrefetchScalarGridSpec(
            num_scalar_prefetch=0,
            grid=(B,),
            in_specs=in_specs,
            out_specs=pl.BlockSpec((1, S, out_last), lambda b: (b, 0, 0)),
        ),
        compiler_params=pltpu.CompilerParams(
            dimension_semantics=("parallel",),
            vmem_limit_bytes=vmem_limit),
        cost_estimate=cost_estimate,
    )(x, *weights)


def patch_embed(x_img, prep, *, patch_size):
    B, C, H, W = x_img.shape
    P = patch_size
    gh, gw = H // P, W // P
    E = prep["patch_w"].shape[1]
    # Conv2d(kernel=stride=P) == patch extraction + matmul with reshaped weight.
    patches = x_img.reshape(B, C, gh, P, gw, P).transpose(0, 2, 4, 1, 3, 5)
    patches = patches.reshape(B, gh * gw, C * P * P)
    proj = _per_batch_call(_patch_proj_kernel, patches,
                           (prep["patch_w"], prep["patch_b"]), E)
    cls = jnp.broadcast_to(prep["class_token"], (B, 1, E))
    x = jnp.concatenate([cls, proj], axis=1) + prep["pos_embedding"]
    # Pad the sequence to a multiple of 8 so every encoder block is sublane
    # aligned; padded key columns are masked in the attention softmax and the
    # classifier only reads token 0, so the padding never leaks into results.
    seq_valid = x.shape[1]
    seq_pad = ((seq_valid + 7) // 8) * 8
    if seq_pad != seq_valid:
        x = jnp.pad(x, ((0, 0), (0, seq_pad - seq_valid), (0, 0)))
    # TODO(synk): dropout layers (emb/attn/mlp) are inference-mode identities here.
    return x, seq_valid


def msa_block(x, lp, *, num_heads, seq_valid):
    B, S, E = x.shape
    head_dim = E // num_heads
    kernel = functools.partial(_msa_kernel, num_heads=num_heads,
                               head_dim=head_dim, seq_valid=seq_valid)
    interm = S * 3 * E * 6 + S * S * 8 + S * E * 8        # qkv f32+bf16, scores, acc
    ce = pl.CostEstimate(
        flops=B * (2 * S * E * 3 * E + 4 * S * S * E + 2 * S * E * E),
        transcendentals=B * num_heads * S * S,
        bytes_accessed=(2 * B * S * E * 4                    # x in + out (f32)
                        + (E * 3 * E + E * E) * 2            # bf16 weights
                        + (3 * E + 3 * E) * 4))              # biases / LN params
    return _per_batch_call(
        kernel, x,
        (lp["ln1_w"], lp["ln1_b"], lp["w_in_t"], lp["b_in"],
         lp["w_out_t"], lp["b_out"]),
        E, cost_estimate=ce, interm_bytes=interm)


def mlp_block(x, lp):
    B, S, E = x.shape
    M = lp["w1_t"].shape[1]
    interm = S * M * 6 + S * E * 4                           # hidden f32+bf16, xn
    ce = pl.CostEstimate(
        flops=4 * B * S * E * M,
        transcendentals=B * S * M,
        bytes_accessed=(2 * B * S * E * 4 + 2 * E * M * 2 + (M + 3 * E) * 4))
    return _per_batch_call(
        _mlp_kernel, x,
        (lp["ln2_w"], lp["ln2_b"], lp["w1_t"], lp["b1"], lp["w2_t"], lp["b2"]),
        E, cost_estimate=ce, interm_bytes=interm)


def classifier_head(x_cls, prep):
    B, E = x_cls.shape
    NC = prep["head_w_t"].shape[1]
    return pl.pallas_call(
        _classifier_kernel,
        out_shape=jax.ShapeDtypeStruct((B, NC), jnp.float32),
        grid_spec=pltpu.PrefetchScalarGridSpec(
            num_scalar_prefetch=0,
            grid=(1,),
            in_specs=[
                pl.BlockSpec((B, E), lambda i: (0, 0)),
                pl.BlockSpec((1, E), lambda i: (0, 0)),
                pl.BlockSpec((1, E), lambda i: (0, 0)),
                pl.BlockSpec((E, NC), lambda i: (0, 0)),
                pl.BlockSpec((1, NC), lambda i: (0, 0)),
            ],
            out_specs=pl.BlockSpec((B, NC), lambda i: (0, 0)),
        ),
        compiler_params=pltpu.CompilerParams(
            dimension_semantics=("arbitrary",)),
    )(x_cls, prep["cls_ln_w"], prep["cls_ln_b"], prep["head_w_t"], prep["head_b"])


def vit_forward(x_img, prep, *, patch_size, num_heads):
    x, seq_valid = patch_embed(x_img, prep, patch_size=patch_size)
    for lp in prep["layers"]:
        # Residual adds are fused inside the kernels (o = f(x) + x).
        x = msa_block(x, lp, num_heads=num_heads, seq_valid=seq_valid)
        x = mlp_block(x, lp)
    # TODO(synk): for v5e, carrying the inter-layer stream in bf16 would halve
    # HBM traffic per sub-block (validate accuracy over many layers first).
    return classifier_head(x[:, 0, :], prep)


# ----------------------------------------------------------------------------
# parameter construction (PyTorch layouts) and one-time preparation
# ----------------------------------------------------------------------------
def init_vit_params(key, *, img_size, in_channels, patch_size, emb_dim, mlp_size,
                    num_heads, num_layers, num_classes):
    n_patches = (img_size // patch_size) ** 2
    kit = iter(jax.random.split(key, 16 + 16 * num_layers))

    def nrm(shape, std):
        return std * jax.random.normal(next(kit), shape, dtype=jnp.float32)

    params = {
        "conv_w": nrm((emb_dim, in_channels, patch_size, patch_size), 0.05),
        "conv_b": nrm((emb_dim,), 0.02),
        "class_token": nrm((1, 1, emb_dim), 0.02),
        "pos_embedding": nrm((1, n_patches + 1, emb_dim), 0.02),
        "cls_ln_w": 1.0 + nrm((emb_dim,), 0.02),
        "cls_ln_b": nrm((emb_dim,), 0.02),
        "head_w": nrm((num_classes, emb_dim), 0.05),
        "head_b": nrm((num_classes,), 0.02),
        "layers": [],
    }
    for _ in range(num_layers):
        params["layers"].append({
            "ln1_w": 1.0 + nrm((emb_dim,), 0.02),
            "ln1_b": nrm((emb_dim,), 0.02),
            "in_proj_w": nrm((3 * emb_dim, emb_dim), 0.05),
            "in_proj_b": nrm((3 * emb_dim,), 0.02),
            "out_proj_w": nrm((emb_dim, emb_dim), 0.05),
            "out_proj_b": nrm((emb_dim,), 0.02),
            "ln2_w": 1.0 + nrm((emb_dim,), 0.02),
            "ln2_b": nrm((emb_dim,), 0.02),
            "mlp_w1": nrm((mlp_size, emb_dim), 0.05),
            "mlp_b1": nrm((mlp_size,), 0.02),
            "mlp_w2": nrm((emb_dim, mlp_size), 0.05),
            "mlp_b2": nrm((emb_dim,), 0.02),
        })
    return params


def prepare_params(params, *, num_heads):
    """One-time weight prep (transpose, scale-fold, bf16 cast) outside the
    per-layer call path, so no per-call transposes/casts feed the kernels."""
    E = params["conv_w"].shape[0]
    head_dim = E // num_heads
    scale = 1.0 / math.sqrt(head_dim)
    qkv_scale = jnp.concatenate([jnp.full((E,), scale, jnp.float32),
                                 jnp.ones((2 * E,), jnp.float32)])

    prep = {
        "patch_w": params["conv_w"].reshape(E, -1).T.astype(jnp.bfloat16),  # (C*P*P, E)
        "patch_b": params["conv_b"].reshape(1, E),
        "class_token": params["class_token"],
        "pos_embedding": params["pos_embedding"],
        "cls_ln_w": params["cls_ln_w"].reshape(1, E),
        "cls_ln_b": params["cls_ln_b"].reshape(1, E),
        "head_w_t": params["head_w"].T,                        # (E, NC) f32
        "head_b": params["head_b"].reshape(1, -1),
        "layers": [],
    }
    for lp in params["layers"]:
        prep["layers"].append({
            "ln1_w": lp["ln1_w"].reshape(1, E),
            "ln1_b": lp["ln1_b"].reshape(1, E),
            # fold 1/sqrt(head_dim) into the Q part of the in-projection
            "w_in_t": (lp["in_proj_w"].T * qkv_scale[None, :]).astype(jnp.bfloat16),
            "b_in": (lp["in_proj_b"] * qkv_scale).reshape(1, 3 * E),
            "w_out_t": lp["out_proj_w"].T.astype(jnp.bfloat16),
            "b_out": lp["out_proj_b"].reshape(1, E),
            "ln2_w": lp["ln2_w"].reshape(1, E),
            "ln2_b": lp["ln2_b"].reshape(1, E),
            "w1_t": lp["mlp_w1"].T.astype(jnp.bfloat16),
            "b1": lp["mlp_b1"].reshape(1, -1),
            "w2_t": lp["mlp_w2"].T.astype(jnp.bfloat16),
            "b2": lp["mlp_b2"].reshape(1, E),
        })
    return prep


# ----------------------------------------------------------------------------
# pure-JAX f32 reference (mirrors the PyTorch forward, eval mode)
# ----------------------------------------------------------------------------
def vit_reference(x_img, params, *, patch_size, num_heads):
    B, C, H, W = x_img.shape
    E = params["conv_w"].shape[0]
    P = patch_size
    gh, gw = H // P, W // P
    Dh = E // num_heads

    patches = x_img.reshape(B, C, gh, P, gw, P).transpose(0, 2, 4, 1, 3, 5)
    patches = patches.reshape(B, gh * gw, C * P * P)
    x = patches @ params["conv_w"].reshape(E, -1).T + params["conv_b"]
    cls = jnp.broadcast_to(params["class_token"], (B, 1, E))
    x = jnp.concatenate([cls, x], axis=1) + params["pos_embedding"]

    for lp in params["layers"]:
        xn = _layer_norm(x, lp["ln1_w"], lp["ln1_b"])
        qkv = jnp.einsum("bse,fe->bsf", xn, lp["in_proj_w"]) + lp["in_proj_b"]
        q, k, v = jnp.split(qkv, 3, axis=-1)

        def heads(t):
            return t.reshape(B, -1, num_heads, Dh).transpose(0, 2, 1, 3)

        qh, kh, vh = heads(q), heads(k), heads(v)
        s = jnp.einsum("bhqd,bhkd->bhqk", qh, kh) / math.sqrt(Dh)
        p = jax.nn.softmax(s, axis=-1)
        o = jnp.einsum("bhqk,bhkd->bhqd", p, vh).transpose(0, 2, 1, 3).reshape(B, -1, E)
        x = jnp.einsum("bse,fe->bsf", o, lp["out_proj_w"]) + lp["out_proj_b"] + x

        xn = _layer_norm(x, lp["ln2_w"], lp["ln2_b"])
        h = jnp.einsum("bse,me->bsm", xn, lp["mlp_w1"]) + lp["mlp_b1"]
        h = jax.nn.gelu(h, approximate=False)
        x = jnp.einsum("bsm,em->bse", h, lp["mlp_w2"]) + lp["mlp_b2"] + x

    xc = _layer_norm(x[:, 0, :], params["cls_ln_w"], params["cls_ln_b"])
    return xc @ params["head_w"].T + params["head_b"]


# ----------------------------------------------------------------------------
if __name__ == "__main__":
    # Small ViT: 16x16 RGB image, 8x8 patches -> 4 patches + class token (S=5,
    # padded to 8 inside the pipeline), emb_dim=32, 4 heads, mlp=64,
    # 2 encoder layers, 10 classes.
    IMG, C, P = 16, 3, 8
    E, H, M, L, NC = 32, 4, 64, 2, 10
    B = 2

    key = jax.random.PRNGKey(0)
    kx, kp = jax.random.split(key)
    x_img = jax.random.normal(kx, (B, C, IMG, IMG), dtype=jnp.float32)

    params = init_vit_params(kp, img_size=IMG, in_channels=C, patch_size=P,
                             emb_dim=E, mlp_size=M, num_heads=H,
                             num_layers=L, num_classes=NC)
    prep = prepare_params(params, num_heads=H)

    logits = vit_forward(x_img, prep, patch_size=P, num_heads=H)
    logits = jax.block_until_ready(logits)

    ref = vit_reference(x_img, params, patch_size=P, num_heads=H)
    assert logits.shape == (B, NC)
    err = float(jnp.max(jnp.abs(logits - ref)))
    # bf16 matmuls + approx softmax/erf reciprocals vs f32 reference -> loose tolerance.
    assert err < 5e-2, f"mismatch vs reference: max abs err = {err}"

    print("KERNEL_OK")
</pallas_src>

<mosaic_0001>
module attributes {stable_mosaic.version = 11 : i64} {
  func.func @_patch_proj_kernel(%arg0: i32, %arg1: memref<1x4x192xf32, #tpu.memory_space<vmem>>, %arg2: memref<192x32xbf16, #tpu.memory_space<vmem>>, %arg3: memref<1x32xf32, #tpu.memory_space<vmem>>, %arg4: memref<1x4x32xf32, #tpu.memory_space<vmem>>) attributes {dimension_semantics = [#tpu.dimension_semantics<parallel>], iteration_bounds = array<i64: 2>, scalar_prefetch = 0 : i64, scratch_operands = 0 : i64, tpu.core_type = #tpu.core_type<tc>, window_params = [{transform_indices = @transform_0, window_bounds = array<i64: 1, 4, 192>}, {pipeline_mode = #tpu.pipeline_mode<synchronous>, transform_indices = @transform_1, window_bounds = array<i64: 192, 32>}, {pipeline_mode = #tpu.pipeline_mode<synchronous>, transform_indices = @transform_2, window_bounds = array<i64: 1, 32>}, {transform_indices = @transform_3, window_bounds = array<i64: 1, 4, 32>}]} {
    %c0 = arith.constant 0 : index
    %c0_0 = arith.constant 0 : index
    %c0_1 = arith.constant 0 : index
    %0 = vector.load %arg1[%c0, %c0_0, %c0_1] : memref<1x4x192xf32, #tpu.memory_space<vmem>>, vector<1x4x192xf32>
    %1 = vector.shape_cast %0 : vector<1x4x192xf32> to vector<4x192xf32>
    %2 = arith.truncf %1 : vector<4x192xf32> to vector<4x192xbf16>
    %c0_2 = arith.constant 0 : index
    %c0_3 = arith.constant 0 : index
    %3 = vector.load %arg2[%c0_2, %c0_3] : memref<192x32xbf16, #tpu.memory_space<vmem>>, vector<192x32xbf16>
    %cst = arith.constant dense<0.000000e+00> : vector<4x32xf32>
    %4 = tpu.matmul %2, %3, %cst {dimension_numbers = #tpu.dot_dimension_numbers<[1], [0], [0], [1], [0, 0, 1, 1], [], []>} : vector<4x192xbf16>, vector<192x32xbf16>, vector<4x32xf32> -> vector<4x32xf32>
    %c0_4 = arith.constant 0 : index
    %c0_5 = arith.constant 0 : index
    %5 = vector.load %arg3[%c0_4, %c0_5] : memref<1x32xf32, #tpu.memory_space<vmem>>, vector<1x32xf32>
    %6 = vector.shape_cast %5 : vector<1x32xf32> to vector<32xf32>
    %7 = vector.shape_cast %6 : vector<32xf32> to vector<1x32xf32>
    %8 = vector.broadcast %7 : vector<1x32xf32> to vector<4x32xf32>
    %9 = arith.addf %4, %8 : vector<4x32xf32>
    %c0_6 = arith.constant 0 : index
    %c0_7 = arith.constant 0 : index
    %c0_8 = arith.constant 0 : index
    %10 = vector.load %arg4[%c0_6, %c0_7, %c0_8] : memref<1x4x32xf32, #tpu.memory_space<vmem>>, vector<1x4x32xf32>
    %11 = vector.shape_cast %10 : vector<1x4x32xf32> to vector<4x32xf32>
    %12 = vector.shape_cast %9 : vector<4x32xf32> to vector<1x4x32xf32>
    tpu.vector_store %arg4[%c0_6, %c0_7, %c0_8], %12 {strides = array<i32>} : memref<1x4x32xf32, #tpu.memory_space<vmem>>, vector<1x4x32xf32>,
    return
  }
  func.func @transform_0(%arg0: i32) -> (i32, i32, i32) {
    %c0_i32 = arith.constant 0 : i32
    %c0_i32_0 = arith.constant 0 : i32
    %c0_i32_1 = arith.constant 0 : i32
    return %arg0, %c0_i32, %c0_i32_0 : i32, i32, i32
  }
  func.func @transform_1(%arg0: i32) -> (i32, i32) {
    %c0_i32 = arith.constant 0 : i32
    %c0_i32_0 = arith.constant 0 : i32
    %c0_i32_1 = arith.constant 0 : i32
    return %c0_i32, %c0_i32_0 : i32, i32
  }
  func.func @transform_2(%arg0: i32) -> (i32, i32) {
    %c0_i32 = arith.constant 0 : i32
    %c0_i32_0 = arith.constant 0 : i32
    %c0_i32_1 = arith.constant 0 : i32
    return %c0_i32, %c0_i32_0 : i32, i32
  }
  func.func @transform_3(%arg0: i32) -> (i32, i32, i32) {
    %c0_i32 = arith.constant 0 : i32
    %c0_i32_0 = arith.constant 0 : i32
    %c0_i32_1 = arith.constant 0 : i32
    return %arg0, %c0_i32, %c0_i32_0 : i32, i32, i32
  }
}

</mosaic_0001>

<llo_original>
// kernel: tpu_custom_call.1
$region0: #{tpu_custom_call.1}
  #allocation0 [shape = 'u32[]', space=smem, size = 0x4, offset = 0x4, fixed_abs, tag = 'smem constant byte address 0x4 - core index']
  #allocation1 [shape = 'u32[144,128]{1,0:T(1,128)}', space=vmem, size = 0x12000, scoped, tag = 'internal scratch']
  %s0 = inlined_call_operand.vmem [shape: f32[2,4,192], index: 0, kind: input, shape index: {}]
  %s1 = inlined_call_operand.vmem [shape: bf16[192,32], index: 1, kind: input, shape index: {}]
  %s2 = inlined_call_operand.vmem [shape: f32[1,32], index: 2, kind: input, shape index: {}]
  %s3 = inlined_call_operand.hbm [shape: f32[2,4,32], index: 3, kind: output, shape index: {}]
  %s4 = sld [smem:[#allocation0]]
  $region45: #{tpu_custom_call.1} parent=0
    _
  %s6 = ssub.s32 1, %s4
  %s7 = scalar_select 0, %s6, %s4
  $region1: #{tpu_custom_call.1} parent=0
    #allocation2 [shape = 'u8[4096]{0}', space=vmem, size = 0x1000, scoped, tag = 'output window, operand 0']
    #allocation3 [shape = 's32[2]{0}', space=sflag, size = 0x8, scoped, tag = 'scoped memory for tpu_custom_call.1']
    %8 = vsyncpa [#allocation3], 0
    %s9 = scalar_lea.sflag [#allocation3], 1
    %10 = vsyncpa %s9, 0
    loop: start=0, step=1, limit=4
    $region2: #{tpu_custom_call.1} parent=1 // loop_pre_header
      _
    $region3: #{tpu_custom_call.1} parent=1 // loop_header
      %s12 = sphi 0, %s16
      %p13 = scmp.ge.s32.totalorder %s12, 4
      %s22 = sphi 0, %s24
      %s25 = sphi 0, %s22
      %s26 = sphi 0, %s25
      %s42 = sphi 0, %s26
      %s46 = sphi 0, %s46
      %s48 = sphi 0, %s46
      %s49 = sphi 0, %s48
      %s63 = sphi 0, %s49
      %s67 = sphi 0, %s67
      %s69 = sphi 0, %s67
      %s70 = sphi 0, %s69
      %s84 = sphi 0, %s70
      %s90 = sphi 0, %s92
      %s93 = sphi 0, %s90
      %s94 = sphi 0, %s93
      %s110 = sphi 0, %s94
    $region4: #{tpu_custom_call.1} parent=1 // loop_header_branch
      %15 = sbr.rel (%p13) target = $region8
    $region5: #{tpu_custom_call.1} parent=1 // loop_body
      %s17 = ssub.s32 %s12, 1
      %s18 = ssub.s32 %s12, 2
      %s19 = sadd.s32 %s12, 1
      %s20 = ssub.s32 %s12, %s19
      %p21 = scmp.eq.s32.totalorder %s20, 0
      %s23 = sadd.s32 %s22, 1
      %s24 = scalar_select %p21, %s22, %s23
      %p27 = pneg %p21
      %p28 = scmp.eq.s32.totalorder %s12, 1
      %p29 = por %p27, %p28
      %p30 = scmp.ne.s32.totalorder %s22, %s25
      %p31 = scmp.eq.s32.totalorder %s12, 0
      %p32 = por %p30, %p31
      %p33 = scmp.ne.s32.totalorder %s22, %s25
      %p34 = scmp.eq.s32.totalorder %s17, 1
      %p35 = por %p33, %p34
      %p36 = scmp.ne.s32.totalorder %s25, %s26
      %p37 = scmp.eq.s32.totalorder %s17, 0
      %p38 = por %p36, %p37
      %p39 = scmp.ne.s32.totalorder %s25, %s26
      %p40 = scmp.eq.s32.totalorder %s18, 1
      %p41 = por %p39, %p40
      %p43 = scmp.ne.s32.totalorder %s26, %s42
      %p44 = scmp.eq.s32.totalorder %s18, 0
      %p45 = por %p43, %p44
      %s47 = sadd.s32 %s46, 1
      %p50 = scmp.eq.s32.totalorder %s12, 1
      %p51 = scmp.ne.s32.totalorder %s46, %s48
      %p52 = scmp.eq.s32.totalorder %s12, 0
      %p53 = por %p51, %p52
      %p54 = scmp.ne.s32.totalorder %s46, %s48
      %p55 = scmp.eq.s32.totalorder %s17, 1
      %p56 = por %p54, %p55
      %p57 = scmp.ne.s32.totalorder %s48, %s49
      %p58 = scmp.eq.s32.totalorder %s17, 0
      %p59 = por %p57, %p58
      %p60 = scmp.ne.s32.totalorder %s48, %s49
      %p61 = scmp.eq.s32.totalorder %s18, 1
      %p62 = por %p60, %p61
      %p64 = scmp.ne.s32.totalorder %s49, %s63
      %p65 = scmp.eq.s32.totalorder %s18, 0
      %p66 = por %p64, %p65
      %s68 = sadd.s32 %s67, 1
      %p71 = scmp.eq.s32.totalorder %s12, 1
      %p72 = scmp.ne.s32.totalorder %s67, %s69
      %p73 = scmp.eq.s32.totalorder %s12, 0
      %p74 = por %p72, %p73
      %p75 = scmp.ne.s32.totalorder %s67, %s69
      %p76 = scmp.eq.s32.totalorder %s17, 1
      %p77 = por %p75, %p76
      %p78 = scmp.ne.s32.totalorder %s69, %s70
      %p79 = scmp.eq.s32.totalorder %s17, 0
      %p80 = por %p78, %p79
      %p81 = scmp.ne.s32.totalorder %s69, %s70
      %p82 = scmp.eq.s32.totalorder %s18, 1
      %p83 = por %p81, %p82
      %p85 = scmp.ne.s32.totalorder %s70, %s84
      %p86 = scmp.eq.s32.totalorder %s18, 0
      %p87 = por %p85, %p86
      %s88 = ssub.s32 %s12, %s19
      %p89 = scmp.eq.s32.totalorder %s88, 0
      %s91 = sadd.s32 %s90, 1
      %s92 = scalar_select %p89, %s90, %s91
      %p95 = pneg %p89
      %p96 = scmp.eq.s32.totalorder %s12, 1
      %p97 = por %p95, %p96
      %p98 = scmp.ne.s32.totalorder %s90, %s93
      %p99 = scmp.eq.s32.totalorder %s12, 0
      %p100 = por %p98, %p99
      %p101 = scmp.ne.s32.totalorder %s90, %s93
      %p102 = scmp.eq.s32.totalorder %s17, 1
      %p103 = por %p101, %p102
      %p104 = scmp.ne.s32.totalorder %s93, %s94
      %p105 = scmp.eq.s32.totalorder %s17, 0
      %p106 = por %p104, %p105
      %p107 = scmp.ne.s32.totalorder %s93, %s94
      %p108 = scmp.eq.s32.totalorder %s18, 1
      %p109 = por %p107, %p108
      %p111 = scmp.ne.s32.totalorder %s94, %s110
      %p112 = scmp.eq.s32.totalorder %s18, 0
      %p113 = por %p111, %p112
      %p114 = scmp.le.s32.totalorder 1, %s12
      %p115 = scmp.lt.s32.totalorder %s12, 3
      %p116 = pnand %p114, %p115
      %p117 = pneg %p116
      // Predicated region
      $region9: #{tpu_custom_call.1} parent=5 // pred_check
        _
      $region10: #{tpu_custom_call.1} parent=5 // pred_check_branch
        %119 = sbr.rel (%p116) target = $region12
      $region11: #{tpu_custom_call.1} parent=5 // pred_region
        %s120 = ssub.s32 %s12, 1
        // Predicated region
        $region13: #{tpu_custom_call.1} parent=11 // pred_check
          %p121 = pneg %p59
        $region14: #{tpu_custom_call.1} parent=11 // pred_check_branch
          %123 = sbr.rel (%p121) target = $region16
        $region15: #{tpu_custom_call.1} parent=11 // pred_region
          _
        $region16: #{tpu_custom_call.1} parent=11 // pred_fallthru
          _
        // Predicated region
        $region17: #{tpu_custom_call.1} parent=11 // pred_check
          %p124 = pneg %p80
        $region18: #{tpu_custom_call.1} parent=11 // pred_check_branch
          %126 = sbr.rel (%p124) target = $region20
        $region19: #{tpu_custom_call.1} parent=11 // pred_region
          _
        $region20: #{tpu_custom_call.1} parent=11 // pred_fallthru
          _
      $region12: #{tpu_custom_call.1} parent=5 // pred_fallthru
        _
      %p127 = scmp.lt.s32.totalorder %s12, 2
      // Predicated region
      $region21: #{tpu_custom_call.1} parent=5 // pred_check
        %p128 = pneg %p127
      $region22: #{tpu_custom_call.1} parent=5 // pred_check_branch
        %130 = sbr.rel (%p128) target = $region24
      $region23: #{tpu_custom_call.1} parent=5 // pred_region
        // Predicated region
        $region25: #{tpu_custom_call.1} parent=23 // pred_check
          %p131 = pneg %p32
        $region26: #{tpu_custom_call.1} parent=23 // pred_check_branch
          %133 = sbr.rel (%p131) target = $region28
        $region27: #{tpu_custom_call.1} parent=23 // pred_region
          %p134 = scmp.lt.s32.totalorder %s12, 1
          %s135 = scalar_select %p134, %s12, 1
          %s136 = smul.addr %s135, 2
          %s137 = smul.addr %s136, 4
          %s138 = scalar_lea.vmem %s0, %s137
        $region28: #{tpu_custom_call.1} parent=23 // pred_fallthru
          _
      $region24: #{tpu_custom_call.1} parent=5 // pred_fallthru
        _
      %p139 = scmp.le.s32.totalorder 1, %s12
      %p140 = scmp.lt.s32.totalorder %s12, 3
      %p141 = pnand %p139, %p140
      %p142 = pneg %p141
      // Predicated region
      $region29: #{tpu_custom_call.1} parent=5 // pred_check
        _
      $region30: #{tpu_custom_call.1} parent=5 // pred_check_branch
        %144 = sbr.rel (%p141) target = $region32
      $region31: #{tpu_custom_call.1} parent=5 // pred_region
        %s145 = ssub.s32 %s12, 1
        %p146 = scmp.lt.s32.totalorder %s17, 1
        %s147 = scalar_select %p146, %s17, 1
        %s148 = smul.addr %s147, 2
        %s149 = smul.addr %s148, 4
        %s150 = scalar_lea.vmem %s0, %s149
        %p151 = pneg %p38
        %p152 = pneg %p35
        %p153 = pneg %p59
        %p154 = pneg %p56
        %p155 = pneg %p80
        %p156 = pneg %p77
        %p157 = pneg %p106
        %p158 = pneg %p103
        %s159 = sand.u32 %s93, 1
        %s160 = scalar_lea.sflag [#allocation3], %s159
        %s161 = sand.u32 %s93, 1
        %s162 = smul.addr %s161, 4
        %s163 = scalar_lea.vmem [#allocation2], %s162
        %p164 = scmp.lt.s32.totalorder %s17, 1
        %s165 = scalar_select %p164, %s17, 1
        %s166 = smul.addr %s165, 2
        %s167 = smul.addr %s166, 4
        %s168 = scalar_lea.vmem %s0, %s167
        %v170 = vld [vmem:[%s168] sm:$0xff]
        %v172 = vcombine.high %v170, %v170
        %v174 = vpack.c.bf16 %v170, %v170
        %v175 = vpack.c.bf16 %v172, %v172
        %v176 = vld [vmem:[%s1] sm:$0xf]
        %v177 = vld [vmem:[%s1 + $0x4] sm:$0xf]
        %v178 = vld [vmem:[%s1 + $0x8] sm:$0xf]
        %v179 = vld [vmem:[%s1 + $0xc] sm:$0xf]
        %v180 = vld [vmem:[%s1 + $0x10] sm:$0xf]
        %v181 = vld [vmem:[%s1 + $0x14] sm:$0xf]
        %v182 = vld [vmem:[%s1 + $0x18] sm:$0xf]
        %v183 = vld [vmem:[%s1 + $0x1c] sm:$0xf]
        %v184 = vld [vmem:[%s1 + $0x20] sm:$0xf]
        %v185 = vld [vmem:[%s1 + $0x24] sm:$0xf]
        %v186 = vld [vmem:[%s1 + $0x28] sm:$0xf]
        %v187 = vld [vmem:[%s1 + $0x2c] sm:$0xf]
        %v188 = vld [vmem:[%s1 + $0x30] sm:$0xf]
        %v189 = vld [vmem:[%s1 + $0x34] sm:$0xf]
        %v190 = vld [vmem:[%s1 + $0x38] sm:$0xf]
        %v191 = vld [vmem:[%s1 + $0x3c] sm:$0xf]
        %v192 = vld [vmem:[%s1 + $0x40] sm:$0xf]
        %v193 = vld [vmem:[%s1 + $0x44] sm:$0xf]
        %v194 = vld [vmem:[%s1 + $0x48] sm:$0xf]
        %v195 = vld [vmem:[%s1 + $0x4c] sm:$0xf]
        %v196 = vld [vmem:[%s1 + $0x50] sm:$0xf]
        %v197 = vld [vmem:[%s1 + $0x54] sm:$0xf]
        %v198 = vld [vmem:[%s1 + $0x58] sm:$0xf]
        %v199 = vld [vmem:[%s1 + $0x5c] sm:$0xf]
        %v200 = vld [vmem:[%s2] sm:$0x1]
        %v202 = vlaneseq
        %v203 = vshrl.u32 %v202, 7
        %v204 = vsub.s32 0, %v203
        %v205 = vrot.slane %v200, %v204
        %v231 = vunpack.c.l.b16 %v176
        %v232 = vunpack.c.l.b16 %v177
        %v233 = vunpack.c.l.b16 %v178
        %v234 = vunpack.c.l.b16 %v179
        %v235 = vunpack.c.l.b16 %v180
        %v236 = vunpack.c.l.b16 %v181
        %v237 = vunpack.c.l.b16 %v182
        %v238 = vunpack.c.l.b16 %v183
        %v239 = vunpack.c.l.b16 %v184
        %v240 = vunpack.c.l.b16 %v185
        %v241 = vunpack.c.l.b16 %v186
        %v242 = vunpack.c.l.b16 %v187
        %v243 = vunpack.c.l.b16 %v188
        %v244 = vunpack.c.l.b16 %v189
        %v245 = vunpack.c.l.b16 %v190
        %v246 = vunpack.c.l.b16 %v191
        %v247 = vunpack.c.l.b16 %v192
        %v248 = vunpack.c.l.b16 %v193
        %v249 = vunpack.c.l.b16 %v194
        %v250 = vunpack.c.l.b16 %v195
        %v251 = vunpack.c.l.b16 %v196
        %v252 = vunpack.c.l.b16 %v197
        %v253 = vunpack.c.l.b16 %v198
        %v254 = vunpack.c.l.b16 %v199
        %v255 = vpack.c.b16 %v232, %v231
        %v256 = vpack.c.b16 %v234, %v233
        %v257 = vpack.c.b16 %v236, %v235
        %v258 = vpack.c.b16 %v238, %v237
        %v259 = vpack.c.b16 %v240, %v239
        %v260 = vpack.c.b16 %v242, %v241
        %v261 = vpack.c.b16 %v244, %v243
        %v262 = vpack.c.b16 %v246, %v245
        %v263 = vpack.c.b16 %v248, %v247
        %v264 = vpack.c.b16 %v250, %v249
        %v265 = vpack.c.b16 %v252, %v251
        %v266 = vpack.c.b16 %v254, %v253
        %vm279 = vcmask 523264
        %v281 = vsel %vm279, %v175, 0
        %283 = vmatprep.subr.bf16.mxu0 0
        %284 = vmatpush1.bf16.msra.mxu0 %v262
        %285 = vmatprep.subr.bf16.mxu0 0
        %286 = vmatpush1.bf16.msra.mxu0 %v261
        %287 = vmatprep.subr.bf16.mxu0 0
        %288 = vmatpush1.bf16.msra.mxu0 %v260
        %289 = vmatprep.subr.bf16.mxu0 0
        %290 = vmatpush1.bf16.msra.mxu0 %v259
        %291 = vmatprep.subr.bf16.mxu0 0
        %292 = vmatpush1.bf16.msra.mxu0 %v258
        %293 = vmatprep.subr.bf16.mxu0 0
        %294 = vmatpush1.bf16.msra.mxu0 %v257
        %295 = vmatprep.subr.bf16.mxu0 0
        %296 = vmatpush1.bf16.msra.mxu0 %v256
        %297 = vmatprep.subr.bf16.mxu0 0
        %298 = vmatpush1.bf16.msra.mxu0 %v255
        %299 = vmatprep.subr.bf16.mxu0 0
        %300 = vmatpush2.bf16.msra.mxu0 0
        %301 = vmatprep.subr.bf16.mxu0 0
        %302 = vmatpush2.bf16.msra.mxu0 0
        %303 = vmatprep.subr.bf16.mxu0 0
        %304 = vmatpush2.bf16.msra.mxu0 0
        %305 = vmatprep.subr.bf16.mxu0 0
        %306 = vmatpush2.bf16.msra.mxu0 0
        %307 = vmatprep.subr.bf16.mxu0 0
        %308 = vmatpush2.bf16.msra.mxu0 %v266
        %309 = vmatprep.subr.bf16.mxu0 0
        %310 = vmatpush2.bf16.msra.mxu0 %v265
        %311 = vmatprep.subr.bf16.mxu0 0
        %312 = vmatpush2.bf16.msra.mxu0 %v264
        %313 = vmatprep.subr.bf16.mxu0 0
        %314 = vmatpush2.bf16.msra.mxu0 %v263
        %315 = vmatprep.mubr.bf16.mxu0 %v281
        %316 = vmatmul.mubr.bf16.gmra.mxu0 %v174
        %v317 = vpop.f32.mrf.mxu0
        %v318 = vadd.f32 %v205, %v317
        %v319 = vpop.f32.mrf.mxu0
        %v320 = vpop.f32.mrf.mxu0
        %v321 = vpop.f32.mrf.mxu0
        %322 = vdwg.mxu0
        %vm323 = vcmask 257024
        %324 = vst.msk [vmem:[%s163] sm:$0xf] %vm323, %v318
        %s325 = sand.u32 %s93, 1
        %s326 = scalar_lea.sflag [#allocation3], %s325
        %s327 = sand.u32 %s93, 1
        %s328 = smul.addr %s327, 4
        %s329 = scalar_lea.vmem [#allocation2], %s328
        // Predicated region
        $region33: #{tpu_custom_call.1} parent=31 // pred_check
          %p330 = pneg %p103
        $region34: #{tpu_custom_call.1} parent=31 // pred_check_branch
          %332 = sbr.rel (%p330) target = $region36
        $region35: #{tpu_custom_call.1} parent=31 // pred_region
          %s334 = ssub.s32 64, 64
          %335 = vsyncadd %s326, %s334
          %s336 = smul.addr %s17, 64
          %s337 = scalar_lea.hbm %s3, %s336
          %s339 = sshll.u32 %s329, 4
          %s340 = int_to_ptr.vmem [resolvable:$true] %s339
          %342 = dma.vmem_to_hbm [thread:$0]  %s340, 64, %s337, %s326
        $region36: #{tpu_custom_call.1} parent=31 // pred_fallthru
          _
      $region32: #{tpu_custom_call.1} parent=5 // pred_fallthru
        _
      %p343 = scmp.le.s32.totalorder 2, %s12
      // Predicated region
      $region37: #{tpu_custom_call.1} parent=5 // pred_check
        %p344 = pneg %p343
      $region38: #{tpu_custom_call.1} parent=5 // pred_check_branch
        %346 = sbr.rel (%p344) target = $region40
      $region39: #{tpu_custom_call.1} parent=5 // pred_region
        %s347 = ssub.s32 %s12, 2
        // Predicated region
        $region41: #{tpu_custom_call.1} parent=39 // pred_check
          %p348 = pneg %p109
        $region42: #{tpu_custom_call.1} parent=39 // pred_check_branch
          %350 = sbr.rel (%p348) target = $region44
        $region43: #{tpu_custom_call.1} parent=39 // pred_region
          %s351 = sand.u32 %s94, 1
          %s352 = scalar_lea.sflag [#allocation3], %s351
          %s353 = sand.u32 %s94, 1
          %s354 = smul.addr %s353, 4
          %s355 = scalar_lea.vmem [#allocation2], %s354
          %356 = dma.done %s352, 64
        $region44: #{tpu_custom_call.1} parent=39 // pred_fallthru
          _
      $region40: #{tpu_custom_call.1} parent=5 // pred_fallthru
        _
    $region6: #{tpu_custom_call.1} parent=1 // loop_footer
      %s16 = sadd.s32 1, %s12
    $region7: #{tpu_custom_call.1} parent=1 // loop_footer_branch
      %11 = sbr.rel target = $region3
    $region8: #{tpu_custom_call.1} parent=1 // loop_exit
      _
    %357 = vsyncpa [#allocation3], 1
    %s358 = scalar_lea.sflag [#allocation3], 1
    %359 = vsyncpa %s358, 1

</llo_original>
